<compile_context>
chip_gen: v7x
topology: tpu7x:2x2x1
jax: 0.10.0
libtpu: 0.0.40
codegen_flags: <defaults>
</compile_context>

<pallas_src>
import jax
import jax.numpy as jnp
from jax.experimental import pallas as pl
from jax.experimental.pallas import tpu as pltpu


def _copy_kernel(x_ref, o_ref):
    # Pure replication: write the resident input chunk into the output slot
    # selected by the (innermost) replicate grid axis.  The VMEM->vreg->VMEM
    # copy is far above the HBM roofline, so the kernel stays HBM-bound with
    # (1 + channel)/channel x output-size total traffic.
    o_ref[...] = x_ref[...]


def _tile_layer_pallas(x: jax.Array, channel: int, *, chunk_bytes: int = 1 << 20) -> jax.Array:
    """Pallas path: replicate-innermost auto-pipelined copy."""
    B, C, H, W = x.shape
    chw = C * H * W
    itemsize = jnp.dtype(x.dtype).itemsize

    # Lane-friendly 3-D view of each batch row.
    if chw % 128 == 0:
        D1, D2 = chw // 128, 128          # (rows, 128 lanes): chunkable along D1
    else:
        D1, D2 = C, H * W                 # full-extent trailing dims (always legal)

    row_bytes = D2 * itemsize
    if D1 * row_bytes <= chunk_bytes or D1 < 8:
        d1_chunk = D1                      # whole batch row in one chunk
    else:
        d1_chunk = max(8, (chunk_bytes // row_bytes) // 8 * 8)
        d1_chunk = min(d1_chunk, D1)

    # VMEM guard: 2x input + 2x output buffers must stay well under the default
    # scoped-VMEM limit (16 MiB v5e / 32 MiB v6e, v7x).
    if 4 * d1_chunk * row_bytes > (8 << 20):
        # TODO(synk): pathological shapes (huge rows not divisible by 128) —
        # route through XLA's tile instead of risking a VMEM OOM.
        return jnp.tile(x, (1, channel, 1, 1))

    num_k = pl.cdiv(D1, d1_chunk)
    x3 = x.reshape(B, D1, D2)             # contiguous view; free layout plumbing

    out4 = pl.pallas_call(
        _copy_kernel,
        out_shape=jax.ShapeDtypeStruct((B, channel, D1, D2), x.dtype),
        grid_spec=pltpu.PrefetchScalarGridSpec(
            num_scalar_prefetch=0,
            # Replicate axis innermost: input block index is constant across it,
            # so the input chunk is fetched from HBM once and reused `channel`
            # times; chunk axis next for cross-chunk double-buffering.
            grid=(B, num_k, channel),
            in_specs=[
                pl.BlockSpec((None, d1_chunk, D2), lambda b, k, r: (b, k, 0)),
            ],
            out_specs=pl.BlockSpec(
                (None, None, d1_chunk, D2), lambda b, k, r: (b, r, k, 0)
            ),
        ),
        compiler_params=pltpu.CompilerParams(
            # Batch and chunk axes are independent -> megacore-shardable on v7x
            # (works even for B == 1); replicate axis is the "revisit" axis.
            dimension_semantics=("parallel", "parallel", "arbitrary"),
        ),
    )(x3)

    # (B, channel, D1, D2) -> (B, channel*C, H, W): contiguous, free reshape.
    return out4.reshape(B, channel * C, H, W)


def tile_layer(x: jax.Array, channel: int, *, min_pallas_bytes: int = 1 << 20) -> jax.Array:
    """Equivalent of TileLayer(channel).forward(x) for NCHW x.

    Tiny inputs route to jnp.tile (kernel-launch overhead would dominate);
    larger inputs use the auto-pipelined Pallas replication kernel.
    """
    if channel == 1:
        return x
    if x.size * jnp.dtype(x.dtype).itemsize < min_pallas_bytes:
        return jnp.tile(x, (1, channel, 1, 1))
    return _tile_layer_pallas(x, channel)


if __name__ == "__main__":
    key = jax.random.PRNGKey(0)
    B, C, H, W = 2, 4, 16, 16
    channel = 3  # repeat factor (the module's `channel` arg)

    x = jax.random.normal(key, (B, C, H, W), dtype=jnp.float32)

    # Force the Pallas path (the default wrapper would route this tiny demo
    # input to the jnp.tile fallback).
    y = tile_layer(x, channel, min_pallas_bytes=0)
    y = jax.block_until_ready(y)

    # Reference: torch's x.repeat(1, channel, 1, 1) == jnp.tile along axis 1.
    y_ref = jnp.tile(x, (1, channel, 1, 1))

    assert y.shape == (B, C * channel, H, W), y.shape
    assert y.dtype == x.dtype
    assert jnp.array_equal(y, y_ref), "mismatch vs reference tile"

    # Also check the default small-input routing (fallback path).
    y_small = jax.block_until_ready(tile_layer(x, channel))
    assert jnp.array_equal(y_small, y_ref)

    print("KERNEL_OK")
</pallas_src>

<mosaic_0001>
module attributes {stable_mosaic.version = 11 : i64} {
  func.func @_copy_kernel(%arg0: i32, %arg1: i32, %arg2: i32, %arg3: memref<1x8x128xf32, #tpu.memory_space<vmem>>, %arg4: memref<1x1x8x128xf32, #tpu.memory_space<vmem>>) attributes {dimension_semantics = [#tpu.dimension_semantics<parallel>, #tpu.dimension_semantics<parallel>, #tpu.dimension_semantics<arbitrary>], iteration_bounds = array<i64: 2, 1, 3>, scalar_prefetch = 0 : i64, scratch_operands = 0 : i64, tpu.core_type = #tpu.core_type<tc>, window_params = [{transform_indices = @transform_0, window_bounds = array<i64: 1, 8, 128>}, {transform_indices = @transform_1, window_bounds = array<i64: 1, 1, 8, 128>}]} {
    %c0 = arith.constant 0 : index
    %c0_0 = arith.constant 0 : index
    %c0_1 = arith.constant 0 : index
    %0 = vector.load %arg3[%c0, %c0_0, %c0_1] : memref<1x8x128xf32, #tpu.memory_space<vmem>>, vector<1x8x128xf32>
    %1 = vector.shape_cast %0 : vector<1x8x128xf32> to vector<8x128xf32>
    %c0_2 = arith.constant 0 : index
    %c0_3 = arith.constant 0 : index
    %c0_4 = arith.constant 0 : index
    %c0_5 = arith.constant 0 : index
    %2 = vector.load %arg4[%c0_2, %c0_3, %c0_4, %c0_5] : memref<1x1x8x128xf32, #tpu.memory_space<vmem>>, vector<1x1x8x128xf32>
    %3 = vector.shape_cast %2 : vector<1x1x8x128xf32> to vector<8x128xf32>
    %4 = vector.shape_cast %1 : vector<8x128xf32> to vector<1x1x8x128xf32>
    tpu.vector_store %arg4[%c0_2, %c0_3, %c0_4, %c0_5], %4 {strides = array<i32>} : memref<1x1x8x128xf32, #tpu.memory_space<vmem>>, vector<1x1x8x128xf32>,
    return
  }
  func.func @transform_0(%arg0: i32, %arg1: i32, %arg2: i32) -> (i32, i32, i32) {
    %c0_i32 = arith.constant 0 : i32
    %c0_i32_0 = arith.constant 0 : i32
    return %arg0, %arg1, %c0_i32 : i32, i32, i32
  }
  func.func @transform_1(%arg0: i32, %arg1: i32, %arg2: i32) -> (i32, i32, i32, i32) {
    %c0_i32 = arith.constant 0 : i32
    %c0_i32_0 = arith.constant 0 : i32
    return %arg0, %arg2, %arg1, %c0_i32 : i32, i32, i32, i32
  }
}

</mosaic_0001>

<llo_original>
// kernel: tpu_custom_call.1
$region0: #{tpu_custom_call.1}
  #allocation0 [shape = 'u32[]', space=smem, size = 0x4, offset = 0x4, fixed_abs, tag = 'smem constant byte address 0x4 - core index']
  #allocation1 [shape = 'u32[144,128]{1,0:T(1,128)}', space=vmem, size = 0x12000, scoped, tag = 'internal scratch']
  %s0 = inlined_call_operand.hbm [shape: f32[2,8,128], index: 0, kind: input, shape index: {}]
  %s1 = inlined_call_operand.hbm [shape: f32[2,3,8,128], index: 1, kind: output, shape index: {}]
  %s2 = sld [smem:[#allocation0]]
  $region41: #{tpu_custom_call.1} parent=0
    _
  %s4 = ssub.s32 1, %s2
  %s5 = scalar_select 0, %s4, %s2
  $region1: #{tpu_custom_call.1} parent=0
    #allocation2 [shape = 'u8[8192]{0}', space=vmem, size = 0x2000, scoped, tag = 'input window, operand 0']
    #allocation3 [shape = 's32[2]{0}', space=sflag, size = 0x8, scoped, tag = 'scoped memory for tpu_custom_call.1']
    #allocation4 [shape = 's32[2]{0}', space=sflag, size = 0x8, scoped, tag = 'scoped memory for tpu_custom_call.1']
    #allocation5 [shape = 'u8[8192]{0}', space=vmem, size = 0x2000, scoped, tag = 'output window, operand 0']
    %6 = vsyncpa [#allocation3], 0
    %s7 = scalar_lea.sflag [#allocation3], 1
    %8 = vsyncpa %s7, 0
    %9 = vsyncpa [#allocation4], 0
    %s10 = scalar_lea.sflag [#allocation4], 1
    %11 = vsyncpa %s10, 0
    loop: start=0, step=1, limit=8
    $region2: #{tpu_custom_call.1} parent=1 // loop_pre_header
      _
    $region3: #{tpu_custom_call.1} parent=1 // loop_header
      %s13 = sphi 0, %s17
      %p14 = scmp.ge.s32.totalorder %s13, 8
      %s20 = sphi 0, %s39
      %s21 = sphi 0, %s35
      %s22 = sphi 0, %s31
      %s23 = sphi 0, %s20
      %s24 = sphi 0, %s21
      %s25 = sphi 0, %s22
      %s26 = sphi 0, %s23
      %s27 = sphi 0, %s24
      %s28 = sphi 0, %s25
      %s44 = sphi 0, %s46
      %s47 = sphi 0, %s44
      %s48 = sphi 0, %s47
      %s64 = sphi 0, %s48
      %s74 = sphi 0, %s76
      %s77 = sphi 0, %s74
      %s78 = sphi 0, %s77
      %s94 = sphi 0, %s78
    $region4: #{tpu_custom_call.1} parent=1 // loop_header_branch
      %16 = sbr.rel (%p14) target = $region8
    $region5: #{tpu_custom_call.1} parent=1 // loop_body
      %s18 = ssub.s32 %s13, 1
      %s19 = ssub.s32 %s13, 2
      %s29 = sadd.s32 1, %s22
      %p30 = scmp.ge.s32.totalorder %s29, 3
      %s31 = scalar_select %p30, 0, %s29
      %s32 = sadd.s32 1, %s21
      %s33 = scalar_select %p30, %s32, %s21
      %p34 = scmp.ge.s32.totalorder %s33, 1
      %s35 = scalar_select %p34, 0, %s33
      %s36 = sadd.s32 1, %s20
      %s37 = scalar_select %p34, %s36, %s20
      %p38 = scmp.ge.s32.totalorder %s37, 2
      %s39 = scalar_select %p38, 0, %s37
      %s40 = ssub.s32 %s20, %s39
      %s41 = ssub.s32 %s21, %s35
      %s42 = sor.u32 %s40, %s41
      %p43 = scmp.eq.s32.totalorder %s42, 0
      %s45 = sadd.s32 %s44, 1
      %s46 = scalar_select %p43, %s44, %s45
      %p49 = pneg %p43
      %p50 = scmp.eq.s32.totalorder %s13, 5
      %p51 = por %p49, %p50
      %p52 = scmp.ne.s32.totalorder %s44, %s47
      %p53 = scmp.eq.s32.totalorder %s13, 0
      %p54 = por %p52, %p53
      %p55 = scmp.ne.s32.totalorder %s44, %s47
      %p56 = scmp.eq.s32.totalorder %s18, 5
      %p57 = por %p55, %p56
      %p58 = scmp.ne.s32.totalorder %s47, %s48
      %p59 = scmp.eq.s32.totalorder %s18, 0
      %p60 = por %p58, %p59
      %p61 = scmp.ne.s32.totalorder %s47, %s48
      %p62 = scmp.eq.s32.totalorder %s19, 5
      %p63 = por %p61, %p62
      %p65 = scmp.ne.s32.totalorder %s48, %s64
      %p66 = scmp.eq.s32.totalorder %s19, 0
      %p67 = por %p65, %p66
      %s68 = ssub.s32 %s20, %s39
      %s69 = ssub.s32 %s22, %s31
      %s70 = sor.u32 %s68, %s69
      %s71 = ssub.s32 %s21, %s35
      %s72 = sor.u32 %s70, %s71
      %p73 = scmp.eq.s32.totalorder %s72, 0
      %s75 = sadd.s32 %s74, 1
      %s76 = scalar_select %p73, %s74, %s75
      %p79 = pneg %p73
      %p80 = scmp.eq.s32.totalorder %s13, 5
      %p81 = por %p79, %p80
      %p82 = scmp.ne.s32.totalorder %s74, %s77
      %p83 = scmp.eq.s32.totalorder %s13, 0
      %p84 = por %p82, %p83
      %p85 = scmp.ne.s32.totalorder %s74, %s77
      %p86 = scmp.eq.s32.totalorder %s18, 5
      %p87 = por %p85, %p86
      %p88 = scmp.ne.s32.totalorder %s77, %s78
      %p89 = scmp.eq.s32.totalorder %s18, 0
      %p90 = por %p88, %p89
      %p91 = scmp.ne.s32.totalorder %s77, %s78
      %p92 = scmp.eq.s32.totalorder %s19, 5
      %p93 = por %p91, %p92
      %p95 = scmp.ne.s32.totalorder %s78, %s94
      %p96 = scmp.eq.s32.totalorder %s19, 0
      %p97 = por %p95, %p96
      %p98 = scmp.le.s32.totalorder 1, %s13
      %p99 = scmp.lt.s32.totalorder %s13, 7
      %p100 = pnand %p98, %p99
      %p101 = pneg %p100
      // Predicated region
      $region9: #{tpu_custom_call.1} parent=5 // pred_check
        _
      $region10: #{tpu_custom_call.1} parent=5 // pred_check_branch
        %103 = sbr.rel (%p100) target = $region12
      $region11: #{tpu_custom_call.1} parent=5 // pred_region
        %s104 = ssub.s32 %s13, 1
      $region12: #{tpu_custom_call.1} parent=5 // pred_fallthru
        _
      %p105 = scmp.lt.s32.totalorder %s13, 6
      // Predicated region
      $region13: #{tpu_custom_call.1} parent=5 // pred_check
        %p106 = pneg %p105
      $region14: #{tpu_custom_call.1} parent=5 // pred_check_branch
        %108 = sbr.rel (%p106) target = $region16
      $region15: #{tpu_custom_call.1} parent=5 // pred_region
        // Predicated region
        $region17: #{tpu_custom_call.1} parent=15 // pred_check
          %p109 = pneg %p54
        $region18: #{tpu_custom_call.1} parent=15 // pred_check_branch
          %111 = sbr.rel (%p109) target = $region20
        $region19: #{tpu_custom_call.1} parent=15 // pred_region
          %s112 = sand.u32 %s44, 1
          %s113 = scalar_lea.sflag [#allocation3], %s112
          %s114 = sand.u32 %s44, 1
          %s115 = smul.addr %s114, 8
          %s116 = scalar_lea.vmem [#allocation2], %s115
          %s118 = ssub.s32 128, 128
          %119 = vsyncadd %s113, %s118
          %s120 = sadd.s32 %s21, %s20
          %s121 = smul.addr %s120, 128
          %s122 = scalar_lea.hbm %s0, %s121
          %s124 = sshll.u32 %s116, 4
          %s125 = int_to_ptr.vmem [resolvable:$true] %s124
          %127 = dma.hbm_to_vmem [thread:$0]  %s122, 128, %s125, %s113
        $region20: #{tpu_custom_call.1} parent=15 // pred_fallthru
          _
      $region16: #{tpu_custom_call.1} parent=5 // pred_fallthru
        _
      %p128 = scmp.le.s32.totalorder 1, %s13
      %p129 = scmp.lt.s32.totalorder %s13, 7
      %p130 = pnand %p128, %p129
      %p131 = pneg %p130
      // Predicated region
      $region21: #{tpu_custom_call.1} parent=5 // pred_check
        _
      $region22: #{tpu_custom_call.1} parent=5 // pred_check_branch
        %133 = sbr.rel (%p130) target = $region24
      $region23: #{tpu_custom_call.1} parent=5 // pred_region
        %s134 = ssub.s32 %s13, 1
        %s135 = sand.u32 %s47, 1
        %s136 = scalar_lea.sflag [#allocation3], %s135
        %s137 = sand.u32 %s47, 1
        %s138 = smul.addr %s137, 8
        %s139 = scalar_lea.vmem [#allocation2], %s138
        // Predicated region
        $region25: #{tpu_custom_call.1} parent=23 // pred_check
          %p140 = pneg %p60
        $region26: #{tpu_custom_call.1} parent=23 // pred_check_branch
          %142 = sbr.rel (%p140) target = $region28
        $region27: #{tpu_custom_call.1} parent=23 // pred_region
          %143 = dma.done %s136, 128
        $region28: #{tpu_custom_call.1} parent=23 // pred_fallthru
          _
        %s144 = sand.u32 %s47, 1
        %s145 = scalar_lea.sflag [#allocation3], %s144
        %s146 = sand.u32 %s47, 1
        %s147 = smul.addr %s146, 8
        %s148 = scalar_lea.vmem [#allocation2], %s147
        %p149 = pneg %p60
        %p150 = pneg %p57
        %p151 = pneg %p90
        %p152 = pneg %p87
        %s153 = sand.u32 %s77, 1
        %s154 = scalar_lea.sflag [#allocation4], %s153
        %s155 = sand.u32 %s77, 1
        %s156 = smul.addr %s155, 8
        %s157 = scalar_lea.vmem [#allocation5], %s156
        %v158 = vld [vmem:[%s139] sm:$0xff]
        %159 = vst [vmem:[%s157] sm:$0xff] %v158
        %s160 = sand.u32 %s77, 1
        %s161 = scalar_lea.sflag [#allocation4], %s160
        %s162 = sand.u32 %s77, 1
        %s163 = smul.addr %s162, 8
        %s164 = scalar_lea.vmem [#allocation5], %s163
        // Predicated region
        $region29: #{tpu_custom_call.1} parent=23 // pred_check
          %p165 = pneg %p87
        $region30: #{tpu_custom_call.1} parent=23 // pred_check_branch
          %167 = sbr.rel (%p165) target = $region32
        $region31: #{tpu_custom_call.1} parent=23 // pred_region
          %s169 = ssub.s32 128, 128
          %170 = vsyncadd %s161, %s169
          %s171 = sadd.s32 %s24, %s25
          %s172 = smul.addr %s23, 3
          %s173 = sadd.s32 %s171, %s172
          %s174 = smul.addr %s173, 128
          %s175 = scalar_lea.hbm %s1, %s174
          %s177 = sshll.u32 %s164, 4
          %s178 = int_to_ptr.vmem [resolvable:$true] %s177
          %180 = dma.vmem_to_hbm [thread:$0]  %s178, 128, %s175, %s161
        $region32: #{tpu_custom_call.1} parent=23 // pred_fallthru
          _
      $region24: #{tpu_custom_call.1} parent=5 // pred_fallthru
        _
      %p181 = scmp.le.s32.totalorder 2, %s13
      // Predicated region
      $region33: #{tpu_custom_call.1} parent=5 // pred_check
        %p182 = pneg %p181
      $region34: #{tpu_custom_call.1} parent=5 // pred_check_branch
        %184 = sbr.rel (%p182) target = $region36
      $region35: #{tpu_custom_call.1} parent=5 // pred_region
        %s185 = ssub.s32 %s13, 2
        // Predicated region
        $region37: #{tpu_custom_call.1} parent=35 // pred_check
          %p186 = pneg %p93
        $region38: #{tpu_custom_call.1} parent=35 // pred_check_branch
          %188 = sbr.rel (%p186) target = $region40
        $region39: #{tpu_custom_call.1} parent=35 // pred_region
          %s189 = sand.u32 %s78, 1
          %s190 = scalar_lea.sflag [#allocation4], %s189
          %s191 = sand.u32 %s78, 1
          %s192 = smul.addr %s191, 8
          %s193 = scalar_lea.vmem [#allocation5], %s192
          %194 = dma.done %s190, 128
        $region40: #{tpu_custom_call.1} parent=35 // pred_fallthru
          _
      $region36: #{tpu_custom_call.1} parent=5 // pred_fallthru
        _
    $region6: #{tpu_custom_call.1} parent=1 // loop_footer
      %s17 = sadd.s32 1, %s13
    $region7: #{tpu_custom_call.1} parent=1 // loop_footer_branch
      %12 = sbr.rel target = $region3
    $region8: #{tpu_custom_call.1} parent=1 // loop_exit
      _
    %195 = vsyncpa [#allocation3], 1
    %s196 = scalar_lea.sflag [#allocation3], 1
    %197 = vsyncpa %s196, 1
    %198 = vsyncpa [#allocation4], 1
    %s199 = scalar_lea.sflag [#allocation4], 1
    %200 = vsyncpa %s199, 1

</llo_original>
